<compile_context>
chip_gen: v5e
topology: v5e:2x2
jax: 0.10.0
libtpu: 0.0.40
codegen_flags: <defaults>
</compile_context>

<pallas_src>
import functools

import jax
import jax.numpy as jnp
from jax.experimental import pallas as pl
from jax.experimental.pallas import tpu as pltpu

_HIGH = jax.lax.Precision.HIGHEST


def _round_up(x, m):
    return (x + m - 1) // m * m


def _sublane_multiple(dtype):
    itemsize = jnp.dtype(dtype).itemsize
    return 8 * max(1, 4 // itemsize)          # 8 for f32, 16 for bf16, 32 for int8


def _padded_slab_bytes(c, hw, dtype):
    itemsize = jnp.dtype(dtype).itemsize
    return _round_up(c, _sublane_multiple(dtype)) * _round_up(hw, 128) * itemsize


def _tpu_config():
    """Per-generation VMEM budget / block-size targets + bf16-VPU capability."""
    kind = ""
    try:
        kind = jax.devices()[0].device_kind.lower()
    except Exception:
        pass
    if "v7" in kind:
        # 64 MiB VMEM per TC, 3.2 TB/s HBM: leave headroom below physical,
        # bigger blocks to amortize per-step overhead, >=4 steps for 2 cores.
        return dict(budget=44 << 20, cap=52 << 20, target=6 << 20,
                    min_steps=4, bf16_vpu=True)
    if "v6" in kind:
        return dict(budget=96 << 20, cap=104 << 20, target=4 << 20,
                    min_steps=3, bf16_vpu=True)
    if "v5" in kind and ("lite" in kind or "v5e" in kind):
        return dict(budget=96 << 20, cap=104 << 20, target=4 << 20,
                    min_steps=3, bf16_vpu=False)
    # Unknown / older generation: conservative budgets, keep the f32 upcast.
    return dict(budget=24 << 20, cap=40 << 20, target=2 << 20,
                min_steps=3, bf16_vpu=False)


# -----------------------------------------------------------------------------
# Kernel 1: single pass — full H*W resident per batch element, batch-tiled grid.
# -----------------------------------------------------------------------------
def _atten_fullhw_kernel(x_ref, wch_ref, wfr_ref, o_ref, *, elemwise_f32):
    # x_ref: (TB, C, HW); wch_ref: (C, C); wfr_ref: (1, C); o_ref: (TB, C, HW)
    xe = x_ref[...]
    if elemwise_f32 and xe.dtype != jnp.float32:
        xe = xe.astype(jnp.float32)
    tb, c, hw = xe.shape
    wch = wch_ref[...].astype(jnp.float32)                             # (C, C)
    wfr = wfr_ref[...].astype(xe.dtype)                                # (1, C)

    # --- Channel attention: L1 over HW (f32 accumulation), Linear(C, C), sigmoid.
    l1 = jnp.sum(jnp.abs(xe), axis=2, dtype=jnp.float32)               # (TB, C)
    if c <= 64:
        # Tiny C: VPU broadcast-multiply + reduce (a (TB,C)x(C,C) matmul would
        # use a sliver of the MXU for no gain; the temp is only (TB,C,C)).
        ch_logits = jnp.sum(l1[:, None, :] * wch[None, :, :], axis=-1)  # (TB, C)
    else:
        ch_logits = jax.lax.dot_general(
            l1, wch, (((1,), (1,)), ((), ())),
            precision=_HIGH, preferred_element_type=jnp.float32)        # (TB, C)
    ch = jax.nn.sigmoid(ch_logits).astype(xe.dtype)[:, :, None]         # (TB, C, 1)

    # --- Frequency attention on the MXU: batched (1,C)@(C,HW), f32 accumulate.
    wfr_b = jnp.broadcast_to(wfr[None, :, :], (tb, 1, c))               # (TB, 1, C)
    fr_logits = jnp.einsum("bok,bks->bos", wfr_b, xe,
                           precision=_HIGH,
                           preferred_element_type=jnp.float32)          # (TB, 1, HW)
    fr = jax.nn.sigmoid(fr_logits).astype(xe.dtype)                     # (TB, 1, HW)

    # --- Combine.
    o_ref[...] = jnp.maximum(fr * xe, ch * xe).astype(o_ref.dtype)


# -----------------------------------------------------------------------------
# Kernel 2: apply pass of the two-pass path (channel weights precomputed).
# -----------------------------------------------------------------------------
def _atten_apply_kernel(x_ref, chw_ref, wfr_ref, o_ref, *, elemwise_f32):
    # x_ref: (1, C, TS); chw_ref: (1, 1, C) pre-sigmoided (lane-dense);
    # wfr_ref: (1, C); o_ref: (1, C, TS)
    xe = x_ref[...]
    if elemwise_f32 and xe.dtype != jnp.float32:
        xe = xe.astype(jnp.float32)
    ch = jnp.transpose(chw_ref[...].astype(xe.dtype), (0, 2, 1))        # (1, C, 1)
    wfr = wfr_ref[...].astype(xe.dtype)                                 # (1, C)

    x2 = xe[0]                                                          # (C, TS)
    fr_logits = jnp.dot(wfr, x2, precision=_HIGH,
                        preferred_element_type=jnp.float32)             # (1, TS)
    fr = jax.nn.sigmoid(fr_logits).astype(xe.dtype)[None, :, :]         # (1, 1, TS)

    o_ref[...] = jnp.maximum(fr * xe, ch * xe).astype(o_ref.dtype)


# -----------------------------------------------------------------------------
# Tile-size selection helpers (dtype-aware).
# -----------------------------------------------------------------------------
def _pick_batch_tile(n, io_bytes, cost_bytes, target_bytes, budget_bytes, min_steps):
    """Largest divisor of n whose per-step VMEM cost stays under the budget and
    whose streamed block is near the target size; prefer leaving >= min_steps
    grid steps so double-buffered prefetch (and v7x's 2 cores) stay busy."""
    cap = max(1, min(budget_bytes // max(1, cost_bytes),
                     max(1, target_bytes // max(1, io_bytes))))
    divs = [d for d in range(1, n + 1) if n % d == 0 and d <= cap]
    if not divs:
        return 1
    pref = [d for d in divs if n // d >= min_steps]
    return max(pref) if pref else max(divs)


def _pick_spatial_tile(hw, c, dtype, target_bytes, budget_bytes):
    """Fixed multiple-of-128 spatial tile; the grid uses cdiv so TS need not
    divide HW (Pallas masks the ragged last tile)."""
    itemsize = jnp.dtype(dtype).itemsize
    col_bytes = _round_up(c, _sublane_multiple(dtype)) * itemsize
    # Per step we hold ~4 I/O blocks (in+out, double-buffered) + ~2 f32 temps.
    cap_elems = max(128, min(target_bytes // max(1, col_bytes),
                             budget_bytes // max(1, 6 * col_bytes)))
    ts = (min(cap_elems, _round_up(hw, 128)) // 128) * 128
    return max(128, ts)


# -----------------------------------------------------------------------------
# Wrappers.
# -----------------------------------------------------------------------------
def _atten_single_pass(x, w_ch, w_fr, cfg, elemwise_f32):
    n, c, hw = x.shape
    io_slab = _padded_slab_bytes(c, hw, x.dtype)
    f32_slab = _padded_slab_bytes(c, hw, jnp.float32)
    per_batch_cost = 4 * io_slab + f32_slab            # 2x-buffered in+out + temps
    tb = _pick_batch_tile(n, io_slab, per_batch_cost,
                          cfg["target"], cfg["budget"], cfg["min_steps"])
    weight_bytes = (_round_up(c, 8) + 8) * _round_up(c, 128) * 4
    vmem_limit = min(cfg["cap"],
                     tb * (4 * io_slab + 2 * f32_slab)
                     + 2 * weight_bytes + (4 << 20))

    kernel = functools.partial(_atten_fullhw_kernel, elemwise_f32=elemwise_f32)
    return pl.pallas_call(
        kernel,
        out_shape=jax.ShapeDtypeStruct((n, c, hw), x.dtype),
        grid=(n // tb,),
        in_specs=[
            pl.BlockSpec((tb, c, hw), lambda b: (b, 0, 0)),
            pl.BlockSpec((c, c), lambda b: (0, 0)),      # constant map: VMEM-resident
            pl.BlockSpec((1, c), lambda b: (0, 0)),      # constant map: VMEM-resident
        ],
        out_specs=pl.BlockSpec((tb, c, hw), lambda b: (b, 0, 0)),
        compiler_params=pltpu.CompilerParams(
            dimension_semantics=("parallel",),
            vmem_limit_bytes=int(vmem_limit),
        ),
    )(x, w_ch, w_fr)


def _atten_two_pass(x, w_ch, w_fr, cfg, elemwise_f32):
    n, c, hw = x.shape
    # Pass A (tiny, plain XLA): per-batch channel weights sigmoid(W_ch @ L1).
    # This is the only computation requiring whole-H*W residency.  It re-reads
    # x once from HBM (3x total traffic vs 2x), so this path only triggers when
    # a full (C, HW) slab per batch cannot fit the VMEM budget.
    # TODO(synk): fuse this L1 reduction into x's producer kernel when available.
    l1 = jnp.sum(jnp.abs(x.astype(jnp.float32)), axis=-1)               # (N, C)
    ch_w = jax.nn.sigmoid(l1 @ w_ch.astype(jnp.float32).T)              # (N, C)
    ch_w = ch_w.reshape(n, 1, c)                                        # lane-dense

    # Pass B (Pallas): stream x in (1, C, TS) spatial tiles, apply both attentions.
    ts = _pick_spatial_tile(hw, c, x.dtype, cfg["target"], cfg["budget"])
    itemsize = jnp.dtype(x.dtype).itemsize
    io_block = _round_up(c, _sublane_multiple(x.dtype)) * ts * itemsize
    f32_block = _round_up(c, 8) * ts * 4
    vmem_limit = min(cfg["cap"], 4 * io_block + 2 * f32_block + (4 << 20))

    kernel = functools.partial(_atten_apply_kernel, elemwise_f32=elemwise_f32)
    return pl.pallas_call(
        kernel,
        out_shape=jax.ShapeDtypeStruct((n, c, hw), x.dtype),
        grid=(n, pl.cdiv(hw, ts)),                       # ragged last tile is masked
        in_specs=[
            pl.BlockSpec((1, c, ts), lambda b, s: (b, 0, s)),
            pl.BlockSpec((1, 1, c), lambda b, s: (b, 0, 0)),
            pl.BlockSpec((1, c), lambda b, s: (0, 0)),
        ],
        out_specs=pl.BlockSpec((1, c, ts), lambda b, s: (b, 0, s)),
        compiler_params=pltpu.CompilerParams(
            dimension_semantics=("parallel", "parallel"),
            vmem_limit_bytes=int(vmem_limit),
        ),
    )(x, ch_w, w_fr)


def atten_layer(x_nchw, w_ch, w_fr, *, target_block_bytes=None, vmem_budget_bytes=None):
    """x_nchw: (N, C, H, W); w_ch: (C, C) Linear weight (out, in);
    w_fr: (1, C) flattened 1x1 Conv2d weight -> (N, C, H, W)."""
    n, c, h, w = x_nchw.shape
    hw = h * w
    x = x_nchw.reshape(n, c, hw)

    cfg = dict(_tpu_config())
    if target_block_bytes is not None:
        cfg["target"] = int(target_block_bytes)
    if vmem_budget_bytes is not None:
        cfg["budget"] = min(int(vmem_budget_bytes), cfg["cap"])

    dt = jnp.dtype(x.dtype)
    # Keep elementwise math in the I/O dtype only for bf16 on chips with bf16
    # VPUs (v6e/v7x); otherwise upcast to f32 inside the kernel.
    elemwise_f32 = not (dt == jnp.dtype(jnp.bfloat16) and cfg["bf16_vpu"])

    io_slab = _padded_slab_bytes(c, hw, x.dtype)
    f32_slab = _padded_slab_bytes(c, hw, jnp.float32)
    per_batch_cost = 4 * io_slab + f32_slab
    if per_batch_cost <= cfg["budget"]:
        out = _atten_single_pass(x, w_ch, w_fr, cfg, elemwise_f32)
    else:
        out = _atten_two_pass(x, w_ch, w_fr, cfg, elemwise_f32)
    return out.reshape(n, c, h, w)


def atten_layer_ref(x, w_ch, w_fr):
    """Pure-JAX reference (matches PyTorch AttenLayer semantics)."""
    l1 = jnp.sum(jnp.abs(x), axis=(2, 3))                      # torch.norm(p=1, dim=(2,3))
    ch = jax.nn.sigmoid(l1 @ w_ch.T)                           # (N, C)
    chan_out = ch[:, :, None, None] * x                        # (N, C, H, W)
    fr = jax.nn.sigmoid(jnp.einsum("oc,nchw->nohw", w_fr, x))  # (N, 1, H, W)
    freq_out = fr * x
    return jnp.maximum(freq_out, chan_out)


if __name__ == "__main__":
    key = jax.random.PRNGKey(0)
    k_x, k_wch, k_wfr = jax.random.split(key, 3)

    N, C, H, W = 2, 4, 16, 16
    x = jax.random.normal(k_x, (N, C, H, W), dtype=jnp.float32)
    # Parameter shapes from nn.Linear(C, C, bias=False) and nn.Conv2d(C, 1, 1, bias=False)
    w_ch = jax.random.normal(k_wch, (C, C), dtype=jnp.float32) * 0.1
    w_fr = jax.random.normal(k_wfr, (1, C), dtype=jnp.float32) * 0.1

    ref = atten_layer_ref(x, w_ch, w_fr)

    # Path 1: single-pass kernel (full H*W resident, batch-tiled "parallel" grid).
    out = jax.block_until_ready(atten_layer(x, w_ch, w_fr))
    assert out.shape == (N, C, H, W)
    assert jnp.allclose(out, ref, atol=2e-5, rtol=2e-5), "single-pass mismatch vs reference"

    # Path 2: force the two-pass variant (used when a full (C, HW) slab per batch
    # does not fit the VMEM budget) by shrinking the budget, and verify it too.
    out2 = jax.block_until_ready(
        atten_layer(x, w_ch, w_fr, vmem_budget_bytes=16 << 10))
    assert jnp.allclose(out2, ref, atol=2e-5, rtol=2e-5), "two-pass mismatch vs reference"

    print("KERNEL_OK")
</pallas_src>

<mosaic_0001>
module attributes {stable_mosaic.version = 11 : i64} {
  func.func @_atten_fullhw_kernel(%arg0: i32, %arg1: memref<2x4x256xf32, #tpu.memory_space<vmem>>, %arg2: memref<4x4xf32, #tpu.memory_space<vmem>>, %arg3: memref<1x4xf32, #tpu.memory_space<vmem>>, %arg4: memref<2x4x256xf32, #tpu.memory_space<vmem>>) attributes {dimension_semantics = [#tpu.dimension_semantics<parallel>], iteration_bounds = array<i64: 1>, scalar_prefetch = 0 : i64, scratch_operands = 0 : i64, tpu.core_type = #tpu.core_type<tc>, window_params = [{transform_indices = @transform_0, window_bounds = array<i64: 2, 4, 256>}, {pipeline_mode = #tpu.pipeline_mode<synchronous>, transform_indices = @transform_1, window_bounds = array<i64: 4, 4>}, {pipeline_mode = #tpu.pipeline_mode<synchronous>, transform_indices = @transform_2, window_bounds = array<i64: 1, 4>}, {transform_indices = @transform_3, window_bounds = array<i64: 2, 4, 256>}]} {
    %c0 = arith.constant 0 : index
    %c0_0 = arith.constant 0 : index
    %c0_1 = arith.constant 0 : index
    %0 = vector.load %arg1[%c0, %c0_0, %c0_1] : memref<2x4x256xf32, #tpu.memory_space<vmem>>, vector<2x4x256xf32>
    %c0_2 = arith.constant 0 : index
    %c0_3 = arith.constant 0 : index
    %1 = vector.load %arg2[%c0_2, %c0_3] : memref<4x4xf32, #tpu.memory_space<vmem>>, vector<4x4xf32>
    %c0_4 = arith.constant 0 : index
    %c0_5 = arith.constant 0 : index
    %2 = vector.load %arg3[%c0_4, %c0_5] : memref<1x4xf32, #tpu.memory_space<vmem>>, vector<1x4xf32>
    %3 = math.absf %0 : vector<2x4x256xf32>
    %cst = arith.constant dense<0.000000e+00> : vector<2x4xf32>
    %4 = vector.multi_reduction <add>, %3, %cst [2] : vector<2x4x256xf32> to vector<2x4xf32>
    %5 = vector.shape_cast %4 : vector<2x4xf32> to vector<2x1x4xf32>
    %6 = vector.shape_cast %1 : vector<4x4xf32> to vector<1x4x4xf32>
    %7 = vector.broadcast %5 : vector<2x1x4xf32> to vector<2x4x4xf32>
    %8 = vector.broadcast %6 : vector<1x4x4xf32> to vector<2x4x4xf32>
    %9 = arith.mulf %7, %8 : vector<2x4x4xf32>
    %cst_6 = arith.constant dense<0.000000e+00> : vector<2x4xf32>
    %10 = vector.multi_reduction <add>, %9, %cst_6 [2] : vector<2x4x4xf32> to vector<2x4xf32>
    %11 = arith.negf %10 : vector<2x4xf32>
    %12 = math.exp %11 : vector<2x4xf32>
    %cst_7 = arith.constant 1.000000e+00 : f32
    %13 = vector.broadcast %cst_7 : f32 to vector<2x4xf32>
    %14 = arith.addf %13, %12 : vector<2x4xf32>
    %15 = arith.divf %13, %14 : vector<2x4xf32>
    %16 = vector.shape_cast %15 : vector<2x4xf32> to vector<2x4x1xf32>
    %17 = vector.shape_cast %2 : vector<1x4xf32> to vector<1x1x4xf32>
    %18 = vector.shape_cast %17 : vector<1x1x4xf32> to vector<1x1x4xf32>
    %19 = vector.broadcast %18 : vector<1x1x4xf32> to vector<2x1x4xf32>
    "tpu.trace_start"() <{level = 10 : i32, message = "bok,bks->bos"}> : () -> ()
    %cst_8 = arith.constant dense<0.000000e+00> : vector<2x1x256xf32>
    %20 = tpu.matmul %19, %0, %cst_8 {dimension_numbers = #tpu.dot_dimension_numbers<[2], [1], [1], [2], [0, 0, 0, 1, 1, 2], [0], [0]>, precision = #tpu.contract_precision<fp32>} : vector<2x1x4xf32>, vector<2x4x256xf32>, vector<2x1x256xf32> -> vector<2x1x256xf32>
    "tpu.trace_stop"() : () -> ()
    %21 = arith.negf %20 : vector<2x1x256xf32>
    %22 = math.exp %21 : vector<2x1x256xf32>
    %cst_9 = arith.constant 1.000000e+00 : f32
    %23 = vector.broadcast %cst_9 : f32 to vector<2x1x256xf32>
    %24 = arith.addf %23, %22 : vector<2x1x256xf32>
    %25 = arith.divf %23, %24 : vector<2x1x256xf32>
    %26 = vector.broadcast %25 : vector<2x1x256xf32> to vector<2x4x256xf32>
    %27 = arith.mulf %26, %0 : vector<2x4x256xf32>
    %28 = vector.broadcast %16 : vector<2x4x1xf32> to vector<2x4x256xf32>
    %29 = arith.mulf %28, %0 : vector<2x4x256xf32>
    %30 = arith.maximumf %27, %29 : vector<2x4x256xf32>
    %c0_10 = arith.constant 0 : index
    %c0_11 = arith.constant 0 : index
    %c0_12 = arith.constant 0 : index
    %31 = vector.load %arg4[%c0_10, %c0_11, %c0_12] : memref<2x4x256xf32, #tpu.memory_space<vmem>>, vector<2x4x256xf32>
    tpu.vector_store %arg4[%c0_10, %c0_11, %c0_12], %30 {strides = array<i32>} : memref<2x4x256xf32, #tpu.memory_space<vmem>>, vector<2x4x256xf32>,
    return
  }
  func.func @transform_0(%arg0: i32) -> (i32, i32, i32) {
    %c0_i32 = arith.constant 0 : i32
    %c0_i32_0 = arith.constant 0 : i32
    %c0_i32_1 = arith.constant 0 : i32
    return %arg0, %c0_i32, %c0_i32_0 : i32, i32, i32
  }
  func.func @transform_1(%arg0: i32) -> (i32, i32) {
    %c0_i32 = arith.constant 0 : i32
    %c0_i32_0 = arith.constant 0 : i32
    %c0_i32_1 = arith.constant 0 : i32
    return %c0_i32, %c0_i32_0 : i32, i32
  }
  func.func @transform_2(%arg0: i32) -> (i32, i32) {
    %c0_i32 = arith.constant 0 : i32
    %c0_i32_0 = arith.constant 0 : i32
    %c0_i32_1 = arith.constant 0 : i32
    return %c0_i32, %c0_i32_0 : i32, i32
  }
  func.func @transform_3(%arg0: i32) -> (i32, i32, i32) {
    %c0_i32 = arith.constant 0 : i32
    %c0_i32_0 = arith.constant 0 : i32
    %c0_i32_1 = arith.constant 0 : i32
    return %arg0, %c0_i32, %c0_i32_0 : i32, i32, i32
  }
}

</mosaic_0001>

<llo_original>
// kernel: tpu_custom_call.1
$region0: #{tpu_custom_call.1}
  #allocation0 [shape = 'u32[]', space=smem, size = 0x4, offset = 0x4, fixed_abs, tag = 'smem constant byte address 0x4 - core index']
  #allocation1 [shape = 'u32[72,128]{1,0:T(1,128)}', space=vmem, size = 0x9000, scoped, tag = 'internal scratch']
  %s0 = inlined_call_operand.hbm [shape: f32[2,4,256], index: 0, kind: input, shape index: {}]
  %s1 = inlined_call_operand.hbm [shape: f32[4,4], index: 1, kind: input, shape index: {}]
  %s2 = inlined_call_operand.vmem [shape: f32[1,4], index: 2, kind: input, shape index: {}]
  %s3 = inlined_call_operand.hbm [shape: f32[2,4,256], index: 3, kind: output, shape index: {}]
  %s4 = sld [smem:[#allocation0]]
  $region30: #{tpu_custom_call.1} parent=0
    _
  %s6 = ssub.s32 1, %s4
  %s7 = scalar_select 0, %s6, %s4
  $region1: #{tpu_custom_call.1} parent=0
    #allocation2 [shape = 'u8[8192]{0}', space=vmem, size = 0x2000, scoped, tag = 'input window, operand 0, single buffered']
    #allocation3 [shape = 's32[1]{0}', space=sflag, size = 0x4, scoped, tag = 'scoped memory for tpu_custom_call.1']
    #allocation4 [shape = 's32[1]{0}', space=sflag, size = 0x4, scoped, tag = 'scoped memory for tpu_custom_call.1']
    #allocation5 [shape = 'u8[2048]{0}', space=vmem, size = 0x800, scoped, tag = 'input window, operand 1, single buffered']
    #allocation6 [shape = 's32[1]{0}', space=sflag, size = 0x4, scoped, tag = 'scoped memory for tpu_custom_call.1']
    #allocation7 [shape = 'u8[8192]{0}', space=vmem, size = 0x2000, scoped, tag = 'output window, operand 0, single buffered']
    %8 = vsyncpa [#allocation3], 0
    %9 = vsyncpa [#allocation6], 0
    %10 = vsyncpa [#allocation4], 0
    // Predicated region
    $region2: #{tpu_custom_call.1} parent=1 // pred_check
      _
    $region3: #{tpu_custom_call.1} parent=1 // pred_check_branch
      %12 = sbr.rel (0) target = $region5
    $region4: #{tpu_custom_call.1} parent=1 // pred_region
      %14 = vsyncadd [#allocation3], 0
      %s15 = sshll.u32 %s0, 4
      %s16 = int_to_ptr.hbm [resolvable:$true] %s15
      %s17 = sshll.u32 [#allocation2], 4
      %s18 = int_to_ptr.vmem [resolvable:$true] %s17
      %23 = dma.hbm_to_vmem [thread:$0]  %s16, 256, %s18, [#allocation3], 128, 128, 8
    $region5: #{tpu_custom_call.1} parent=1 // pred_fallthru
      _
    // Predicated region
    $region6: #{tpu_custom_call.1} parent=1 // pred_check
      _
    $region7: #{tpu_custom_call.1} parent=1 // pred_check_branch
      %25 = sbr.rel (0) target = $region9
    $region8: #{tpu_custom_call.1} parent=1 // pred_region
      %27 = vsyncadd [#allocation6], 0
      %s29 = sshll.u32 %s1, 4
      %s30 = int_to_ptr.hbm [resolvable:$true] %s29
      %s31 = sshll.u32 [#allocation5], 4
      %s32 = int_to_ptr.vmem [resolvable:$true] %s31
      %34 = dma.hbm_to_vmem [thread:$0]  %s30, 64, %s32, [#allocation6]
    $region9: #{tpu_custom_call.1} parent=1 // pred_fallthru
      _
    // Predicated region
    $region10: #{tpu_custom_call.1} parent=1 // pred_check
      _
    $region11: #{tpu_custom_call.1} parent=1 // pred_check_branch
      %36 = sbr.rel (0) target = $region13
    $region12: #{tpu_custom_call.1} parent=1 // pred_region
      _
    $region13: #{tpu_custom_call.1} parent=1 // pred_fallthru
      _
    // Predicated region
    $region14: #{tpu_custom_call.1} parent=1 // pred_check
      _
    $region15: #{tpu_custom_call.1} parent=1 // pred_check_branch
      %38 = sbr.rel (0) target = $region17
    $region16: #{tpu_custom_call.1} parent=1 // pred_region
      %40 = dma.done [#allocation3], 256
    $region17: #{tpu_custom_call.1} parent=1 // pred_fallthru
      _
    // Predicated region
    $region18: #{tpu_custom_call.1} parent=1 // pred_check
      _
    $region19: #{tpu_custom_call.1} parent=1 // pred_check_branch
      %42 = sbr.rel (0) target = $region21
    $region20: #{tpu_custom_call.1} parent=1 // pred_region
      %44 = dma.done [#allocation6], 64
    $region21: #{tpu_custom_call.1} parent=1 // pred_fallthru
      _
    %v45 = vld [vmem:[#allocation2] sm:$0xff]
    %v46 = vld [vmem:[#allocation2 + $0x8] sm:$0xff]
    %v47 = vld [vmem:[#allocation5] sm:$0xf]
    %v48 = vld [vmem:[%s2] sm:$0x1]
    %v49 = vand.u32 2147483647, %v45
    %v50 = vand.u32 2147483647, %v46
    %53 = vst [vmem:[#allocation1] ss:$2 sm:$0xff] %v49
    %v54 = vld.sshfl [vmem:[#allocation1] sm:$0xff pattern:$0x75316420]
    %v55 = vld.sshfl [vmem:[#allocation1 + $0x8] sm:$0xff pattern:$0x75316420]
    %s56 = scalar_lea.vmem [#allocation1], 16
    %57 = vst [vmem:[%s56] ss:$2 sm:$0xff] %v50
    %v58 = vld.sshfl [vmem:[#allocation1 + $0x10] sm:$0xff pattern:$0x75316420]
    %v59 = vld.sshfl [vmem:[#allocation1 + $0x18] sm:$0xff pattern:$0x75316420]
    %vm64 = vcmask 1043456
    %v65 = vsel %vm64, %v54, 0.0
    %v66 = vsel %vm64, %v55, 0.0
    %v67 = vadd.f32 %v65, %v66
    %68 = vadd.xlane.f32.xlu0 %v67
    %v69 = vpop.xlane.xlu0 %68
    %v70 = vsel %vm64, %v58, 0.0
    %v71 = vsel %vm64, %v59, 0.0
    %v72 = vadd.f32 %v70, %v71
    %73 = vadd.xlane.f32.xlu0 %v72
    %v74 = vpop.xlane.xlu0 %73
    %v76 = vperm.slane %v47, 0
    %v77 = vlaneseq
    %v78 = vshrl.u32 %v77, 7
    %80 = vset.pattern.permute.xlu0 %v78
    %81 = vperm.xlu0 %80, %v76
    %v82 = vpop.permute.xlu0 %81
    %v83 = vperm.slane %v47, 1
    %v84 = vlaneseq
    %v85 = vshrl.u32 %v84, 7
    %87 = vset.pattern.permute.xlu0 %v85
    %88 = vperm.xlu0 %87, %v83
    %v89 = vpop.permute.xlu0 %88
    %v90 = vperm.slane %v47, 2
    %v91 = vlaneseq
    %v92 = vshrl.u32 %v91, 7
    %94 = vset.pattern.permute.xlu0 %v92
    %95 = vperm.xlu0 %94, %v90
    %v96 = vpop.permute.xlu0 %95
    %v97 = vperm.slane %v47, 3
    %v98 = vlaneseq
    %v99 = vshrl.u32 %v98, 7
    %101 = vset.pattern.permute.xlu0 %v99
    %102 = vperm.xlu0 %101, %v97
    %v103 = vpop.permute.xlu0 %102
    %v108 = vmul.f32 %v69, %v82
    %v109 = vmul.f32 %v69, %v89
    %v110 = vmul.f32 %v69, %v96
    %v111 = vmul.f32 %v69, %v103
    %v112 = vmul.f32 %v74, %v82
    %v113 = vmul.f32 %v74, %v89
    %v114 = vmul.f32 %v74, %v96
    %v115 = vmul.f32 %v74, %v103
    %124 = vset.pattern.permute.xlu0 0
    %125 = vperm.xlu0 %124, %v108
    %v126 = vpop.permute.xlu0 %125
    %127 = vset.pattern.permute.xlu0 0
    %128 = vperm.xlu0 %127, %v109
    %v129 = vpop.permute.xlu0 %128
    %130 = vset.pattern.permute.xlu0 0
    %131 = vperm.xlu0 %130, %v110
    %v132 = vpop.permute.xlu0 %131
    %133 = vset.pattern.permute.xlu0 0
    %134 = vperm.xlu0 %133, %v111
    %v135 = vpop.permute.xlu0 %134
    %136 = vset.pattern.permute.xlu0 0
    %137 = vperm.xlu0 %136, %v112
    %v138 = vpop.permute.xlu0 %137
    %139 = vset.pattern.permute.xlu0 0
    %140 = vperm.xlu0 %139, %v113
    %v141 = vpop.permute.xlu0 %140
    %142 = vset.pattern.permute.xlu0 0
    %143 = vperm.xlu0 %142, %v114
    %v144 = vpop.permute.xlu0 %143
    %145 = vset.pattern.permute.xlu0 0
    %146 = vperm.xlu0 %145, %v115
    %v147 = vpop.permute.xlu0 %146
    %v148 = vlaneseq
    %v149 = vand.u32 %v148, 127
    %v150 = vperm.slane %v126, %v149
    %v151 = vperm.slane %v129, %v149
    %v152 = vperm.slane %v132, %v149
    %v153 = vperm.slane %v135, %v149
    %v154 = vperm.slane %v138, %v149
    %v155 = vperm.slane %v141, %v149
    %v156 = vperm.slane %v144, %v149
    %v157 = vperm.slane %v147, %v149
    %vm158 = vcmask 1041409
    %v159 = vsel %vm158, %v151, %v150
    %vm160 = vcmask 1042434
    %v161 = vsel %vm160, %v152, %v159
    %vm162 = vcmask 1043459
    %v163 = vsel %vm162, %v153, %v161
    %v164 = vsel %vm158, %v155, %v154
    %v165 = vsel %vm160, %v156, %v164
    %v166 = vsel %vm162, %v157, %v165
    %vm169 = vcmask 27648
    %v170 = vsel %vm169, %v163, 0.0
    %171 = vadd.xlane.f32.xlu0 %v170
    %v172 = vpop.xlane.xlu0 %171
    %v173 = vsel %vm169, %v166, 0.0
    %174 = vadd.xlane.f32.xlu0 %v173
    %v175 = vpop.xlane.xlu0 %174
    %v176 = vxor.u32 %v172, 2147483648
    %v177 = vxor.u32 %v175, 2147483648
    %v178 = vmul.f32 %v176, 1.442695
    %v179 = vpow.pop %v178
    %v180 = vmul.f32 %v177, 1.442695
    %v181 = vpow.pop %v180
    %v182 = vadd.f32 %v179, 1.0
    %v183 = vadd.f32 %v181, 1.0
    %v184 = vrcp.pop %v182
    %v185 = vmul.f32 %v182, %v184
    %v186 = vsub.f32 1.0, %v185
    %v187 = vmul.f32 %v184, %v186
    %v188 = vadd.f32 %v184, %v187
    %vm189 = vweird.f32 %v182
    %vm190 = vweird.f32 %v184
    %vm191 = vmor %vm189, %vm190
    %v192 = vsel %vm191, %v184, %v188
    %v193 = vand.u32 2147483647, %v182
    %vm194 = vcmp.eq.f32.partialorder %v193, 8.507059e+37
    %v195 = vand.u32 %v182, 2147483648
    %v196 = vor.u32 1.1754944e-38, %v195
    %v197 = vsel %vm194, %v196, %v192
    %v198 = vmul.f32 1.0, %v197
    %v199 = vrcp.pop %v183
    %v200 = vmul.f32 %v183, %v199
    %v201 = vsub.f32 1.0, %v200
    %v202 = vmul.f32 %v199, %v201
    %v203 = vadd.f32 %v199, %v202
    %vm204 = vweird.f32 %v183
    %vm205 = vweird.f32 %v199
    %vm206 = vmor %vm204, %vm205
    %v207 = vsel %vm206, %v199, %v203
    %v208 = vand.u32 2147483647, %v183
    %vm209 = vcmp.eq.f32.partialorder %v208, 8.507059e+37
    %v210 = vand.u32 %v183, 2147483648
    %v211 = vor.u32 1.1754944e-38, %v210
    %v212 = vsel %vm209, %v211, %v207
    %v213 = vmul.f32 1.0, %v212
    %215 = vst [vmem:[#allocation1] ss:$2 sm:$0xff] %v45
    %v216 = vld.sshfl [vmem:[#allocation1] sm:$0xff pattern:$0x75316420]
    %v217 = vld.sshfl [vmem:[#allocation1 + $0x8] sm:$0xff pattern:$0x75316420]
    %vm218 = vcmask 31744
    %v220 = vsel %vm218, %v48, 0
    %v222 = vsel %vm64, %v216, 0
    %v224 = vsel %vm64, %v217, 0
    %226 = vmatpush.msra.mxu0 0.0
    %227 = vmatpush.msra.mxu0 0.0
    %228 = vmatpush.msra.mxu0 0.0
    %229 = vmatpush.msra.mxu0 0.0
    %230 = vmatpush.msra.mxu0 0.0
    %231 = vmatpush.msra.mxu0 0.0
    %232 = vmatpush.msra.mxu0 0.0
    %233 = vmatpush.msra.mxu0 0.0
    %234 = vmatpush.msra.mxu0 0.0
    %235 = vmatpush.msra.mxu0 0.0
    %236 = vmatpush.msra.mxu0 0.0
    %237 = vmatpush.msra.mxu0 0.0
    %238 = vmatpush.msra.mxu0 0.0
    %239 = vmatpush.msra.mxu0 0.0
    %240 = vmatpush.msra.mxu0 0.0
    %v241 = vand.u32 %v222, 4294901760
    %242 = vmatpush.msra.mxu0 %v241
    %v243 = vand.u32 %v220, 4294901760
    %v244 = vsub.f32 %v220, %v243
    %v245 = vand.u32 %v244, 4294901760
    %v246 = vsub.f32 %v244, %v245
    %v247 = vand.u32 %v246, 4294901760
    %248 = vmatmul.f32.gmra.mxu0 %v247
    %v249 = vpop.f32.mrf.mxu0
    %v250 = vadd.f32 0.0, %v249
    %251 = vdwg.mxu0
    %252 = vmatpush.msra.mxu0 0.0
    %253 = vmatpush.msra.mxu0 0.0
    %254 = vmatpush.msra.mxu0 0.0
    %255 = vmatpush.msra.mxu0 0.0
    %256 = vmatpush.msra.mxu0 0.0
    %257 = vmatpush.msra.mxu0 0.0
    %258 = vmatpush.msra.mxu0 0.0
    %259 = vmatpush.msra.mxu0 0.0
    %260 = vmatpush.msra.mxu0 0.0
    %261 = vmatpush.msra.mxu0 0.0
    %262 = vmatpush.msra.mxu0 0.0
    %263 = vmatpush.msra.mxu0 0.0
    %264 = vmatpush.msra.mxu0 0.0
    %265 = vmatpush.msra.mxu0 0.0
    %266 = vmatpush.msra.mxu0 0.0
    %v267 = vand.u32 %v222, 4294901760
    %v268 = vsub.f32 %v222, %v267
    %v269 = vand.u32 %v268, 4294901760
    %v270 = vsub.f32 %v268, %v269
    %v271 = vand.u32 %v270, 4294901760
    %272 = vmatpush.msra.mxu0 %v271
    %v273 = vand.u32 %v220, 4294901760
    %274 = vmatmul.f32.gmra.mxu0 %v273
    %v275 = vpop.f32.mrf.mxu0
    %v276 = vadd.f32 %v250, %v275
    %277 = vdwg.mxu0
    %278 = vmatpush.msra.mxu0 0.0
    %279 = vmatpush.msra.mxu0 0.0
    %280 = vmatpush.msra.mxu0 0.0
    %281 = vmatpush.msra.mxu0 0.0
    %282 = vmatpush.msra.mxu0 0.0
    %283 = vmatpush.msra.mxu0 0.0
    %284 = vmatpush.msra.mxu0 0.0
    %285 = vmatpush.msra.mxu0 0.0
    %286 = vmatpush.msra.mxu0 0.0
    %287 = vmatpush.msra.mxu0 0.0
    %288 = vmatpush.msra.mxu0 0.0
    %289 = vmatpush.msra.mxu0 0.0
    %290 = vmatpush.msra.mxu0 0.0
    %291 = vmatpush.msra.mxu0 0.0
    %292 = vmatpush.msra.mxu0 0.0
    %v293 = vand.u32 %v222, 4294901760
    %v294 = vsub.f32 %v222, %v293
    %295 = vmatpush.msra.mxu0 %v294
    %v296 = vand.u32 %v220, 4294901760
    %v297 = vsub.f32 %v220, %v296
    %298 = vmatmul.f32.gmra.mxu0 %v297
    %v299 = vpop.f32.mrf.mxu0
    %v300 = vadd.f32 %v276, %v299
    %301 = vdwg.mxu0
    %302 = vmatpush.msra.mxu0 0.0
    %303 = vmatpush.msra.mxu0 0.0
    %304 = vmatpush.msra.mxu0 0.0
    %305 = vmatpush.msra.mxu0 0.0
    %306 = vmatpush.msra.mxu0 0.0
    %307 = vmatpush.msra.mxu0 0.0
    %308 = vmatpush.msra.mxu0 0.0
    %309 = vmatpush.msra.mxu0 0.0
    %310 = vmatpush.msra.mxu0 0.0
    %311 = vmatpush.msra.mxu0 0.0
    %312 = vmatpush.msra.mxu0 0.0
    %313 = vmatpush.msra.mxu0 0.0
    %314 = vmatpush.msra.mxu0 0.0
    %315 = vmatpush.msra.mxu0 0.0
    %316 = vmatpush.msra.mxu0 0.0
    %v317 = vand.u32 %v222, 4294901760
    %318 = vmatpush.msra.mxu0 %v317
    %v319 = vand.u32 %v220, 4294901760
    %v320 = vsub.f32 %v220, %v319
    %v321 = vand.u32 %v320, 4294901760
    %322 = vmatmul.f32.gmra.mxu0 %v321
    %v323 = vpop.f32.mrf.mxu0
    %v324 = vadd.f32 %v300, %v323
    %325 = vdwg.mxu0
    %326 = vmatpush.msra.mxu0 0.0
    %327 = vmatpush.msra.mxu0 0.0
    %328 = vmatpush.msra.mxu0 0.0
    %329 = vmatpush.msra.mxu0 0.0
    %330 = vmatpush.msra.mxu0 0.0
    %331 = vmatpush.msra.mxu0 0.0
    %332 = vmatpush.msra.mxu0 0.0
    %333 = vmatpush.msra.mxu0 0.0
    %334 = vmatpush.msra.mxu0 0.0
    %335 = vmatpush.msra.mxu0 0.0
    %336 = vmatpush.msra.mxu0 0.0
    %337 = vmatpush.msra.mxu0 0.0
    %338 = vmatpush.msra.mxu0 0.0
    %339 = vmatpush.msra.mxu0 0.0
    %340 = vmatpush.msra.mxu0 0.0
    %v341 = vand.u32 %v222, 4294901760
    %v342 = vsub.f32 %v222, %v341
    %v343 = vand.u32 %v342, 4294901760
    %344 = vmatpush.msra.mxu0 %v343
    %v345 = vand.u32 %v220, 4294901760
    %346 = vmatmul.f32.gmra.mxu0 %v345
    %v347 = vpop.f32.mrf.mxu0
    %v348 = vadd.f32 %v324, %v347
    %349 = vdwg.mxu0
    %350 = vmatpush.msra.mxu0 0.0
    %351 = vmatpush.msra.mxu0 0.0
    %352 = vmatpush.msra.mxu0 0.0
    %353 = vmatpush.msra.mxu0 0.0
    %354 = vmatpush.msra.mxu0 0.0
    %355 = vmatpush.msra.mxu0 0.0
    %356 = vmatpush.msra.mxu0 0.0
    %357 = vmatpush.msra.mxu0 0.0
    %358 = vmatpush.msra.mxu0 0.0
    %359 = vmatpush.msra.mxu0 0.0
    %360 = vmatpush.msra.mxu0 0.0
    %361 = vmatpush.msra.mxu0 0.0
    %362 = vmatpush.msra.mxu0 0.0
    %363 = vmatpush.msra.mxu0 0.0
    %364 = vmatpush.msra.mxu0 0.0
    %v365 = vand.u32 %v222, 4294901760
    %366 = vmatpush.msra.mxu0 %v365
    %v367 = vand.u32 %v220, 4294901760
    %368 = vmatmul.f32.gmra.mxu0 %v367
    %v369 = vpop.f32.mrf.mxu0
    %v370 = vadd.f32 %v348, %v369
    %371 = vdwg.mxu0
    %372 = vmatpush.msra.mxu0 0.0
    %373 = vmatpush.msra.mxu0 0.0
    %374 = vmatpush.msra.mxu0 0.0
    %375 = vmatpush.msra.mxu0 0.0
    %376 = vmatpush.msra.mxu0 0.0
    %377 = vmatpush.msra.mxu0 0.0
    %378 = vmatpush.msra.mxu0 0.0
    %379 = vmatpush.msra.mxu0 0.0
    %380 = vmatpush.msra.mxu0 0.0
    %381 = vmatpush.msra.mxu0 0.0
    %382 = vmatpush.msra.mxu0 0.0
    %383 = vmatpush.msra.mxu0 0.0
    %384 = vmatpush.msra.mxu0 0.0
    %385 = vmatpush.msra.mxu0 0.0
    %386 = vmatpush.msra.mxu0 0.0
    %v387 = vand.u32 %v224, 4294901760
    %388 = vmatpush.msra.mxu0 %v387
    %v389 = vand.u32 %v220, 4294901760
    %v390 = vsub.f32 %v220, %v389
    %v391 = vand.u32 %v390, 4294901760
    %v392 = vsub.f32 %v390, %v391
    %v393 = vand.u32 %v392, 4294901760
    %394 = vmatmul.f32.gmra.mxu0 %v393
    %v395 = vpop.f32.mrf.mxu0
    %v396 = vadd.f32 0.0, %v395
    %397 = vdwg.mxu0
    %398 = vmatpush.msra.mxu0 0.0
    %399 = vmatpush.msra.mxu0 0.0
    %400 = vmatpush.msra.mxu0 0.0
    %401 = vmatpush.msra.mxu0 0.0
    %402 = vmatpush.msra.mxu0 0.0
    %403 = vmatpush.msra.mxu0 0.0
    %404 = vmatpush.msra.mxu0 0.0
    %405 = vmatpush.msra.mxu0 0.0
    %406 = vmatpush.msra.mxu0 0.0
    %407 = vmatpush.msra.mxu0 0.0
    %408 = vmatpush.msra.mxu0 0.0
    %409 = vmatpush.msra.mxu0 0.0
    %410 = vmatpush.msra.mxu0 0.0
    %411 = vmatpush.msra.mxu0 0.0
    %412 = vmatpush.msra.mxu0 0.0
    %v413 = vand.u32 %v224, 4294901760
    %v414 = vsub.f32 %v224, %v413
    %v415 = vand.u32 %v414, 4294901760
    %v416 = vsub.f32 %v414, %v415
    %v417 = vand.u32 %v416, 4294901760
    %418 = vmatpush.msra.mxu0 %v417
    %v419 = vand.u32 %v220, 4294901760
    %420 = vmatmul.f32.gmra.mxu0 %v419
    %v421 = vpop.f32.mrf.mxu0
    %v422 = vadd.f32 %v396, %v421
    %423 = vdwg.mxu0
    %424 = vmatpush.msra.mxu0 0.0
    %425 = vmatpush.msra.mxu0 0.0
    %426 = vmatpush.msra.mxu0 0.0
    %427 = vmatpush.msra.mxu0 0.0
    %428 = vmatpush.msra.mxu0 0.0
    %429 = vmatpush.msra.mxu0 0.0
    %430 = vmatpush.msra.mxu0 0.0
    %431 = vmatpush.msra.mxu0 0.0
    %432 = vmatpush.msra.mxu0 0.0
    %433 = vmatpush.msra.mxu0 0.0
    %434 = vmatpush.msra.mxu0 0.0
    %435 = vmatpush.msra.mxu0 0.0
    %436 = vmatpush.msra.mxu0 0.0
    %437 = vmatpush.msra.mxu0 0.0
    %438 = vmatpush.msra.mxu0 0.0
    %v439 = vand.u32 %v224, 4294901760
    %v440 = vsub.f32 %v224, %v439
    %441 = vmatpush.msra.mxu0 %v440
    %v442 = vand.u32 %v220, 4294901760
    %v443 = vsub.f32 %v220, %v442
    %444 = vmatmul.f32.gmra.mxu0 %v443
    %v445 = vpop.f32.mrf.mxu0
    %v446 = vadd.f32 %v422, %v445
    %447 = vdwg.mxu0
    %448 = vmatpush.msra.mxu0 0.0
    %449 = vmatpush.msra.mxu0 0.0
    %450 = vmatpush.msra.mxu0 0.0
    %451 = vmatpush.msra.mxu0 0.0
    %452 = vmatpush.msra.mxu0 0.0
    %453 = vmatpush.msra.mxu0 0.0
    %454 = vmatpush.msra.mxu0 0.0
    %455 = vmatpush.msra.mxu0 0.0
    %456 = vmatpush.msra.mxu0 0.0
    %457 = vmatpush.msra.mxu0 0.0
    %458 = vmatpush.msra.mxu0 0.0
    %459 = vmatpush.msra.mxu0 0.0
    %460 = vmatpush.msra.mxu0 0.0
    %461 = vmatpush.msra.mxu0 0.0
    %462 = vmatpush.msra.mxu0 0.0
    %v463 = vand.u32 %v224, 4294901760
    %464 = vmatpush.msra.mxu0 %v463
    %v465 = vand.u32 %v220, 4294901760
    %v466 = vsub.f32 %v220, %v465
    %v467 = vand.u32 %v466, 4294901760
    %468 = vmatmul.f32.gmra.mxu0 %v467
    %v469 = vpop.f32.mrf.mxu0
    %v470 = vadd.f32 %v446, %v469
    %471 = vdwg.mxu0
    %472 = vmatpush.msra.mxu0 0.0
    %473 = vmatpush.msra.mxu0 0.0
    %474 = vmatpush.msra.mxu0 0.0
    %475 = vmatpush.msra.mxu0 0.0
    %476 = vmatpush.msra.mxu0 0.0
    %477 = vmatpush.msra.mxu0 0.0
    %478 = vmatpush.msra.mxu0 0.0
    %479 = vmatpush.msra.mxu0 0.0
    %480 = vmatpush.msra.mxu0 0.0
    %481 = vmatpush.msra.mxu0 0.0
    %482 = vmatpush.msra.mxu0 0.0
    %483 = vmatpush.msra.mxu0 0.0
    %484 = vmatpush.msra.mxu0 0.0
    %485 = vmatpush.msra.mxu0 0.0
    %486 = vmatpush.msra.mxu0 0.0
    %v487 = vand.u32 %v224, 4294901760
    %v488 = vsub.f32 %v224, %v487
    %v489 = vand.u32 %v488, 4294901760
    %490 = vmatpush.msra.mxu0 %v489
    %v491 = vand.u32 %v220, 4294901760
    %492 = vmatmul.f32.gmra.mxu0 %v491
    %v493 = vpop.f32.mrf.mxu0
    %v494 = vadd.f32 %v470, %v493
    %495 = vdwg.mxu0
    %496 = vmatpush.msra.mxu0 0.0
    %497 = vmatpush.msra.mxu0 0.0
    %498 = vmatpush.msra.mxu0 0.0
    %499 = vmatpush.msra.mxu0 0.0
    %500 = vmatpush.msra.mxu0 0.0
    %501 = vmatpush.msra.mxu0 0.0
    %502 = vmatpush.msra.mxu0 0.0
    %503 = vmatpush.msra.mxu0 0.0
    %504 = vmatpush.msra.mxu0 0.0
    %505 = vmatpush.msra.mxu0 0.0
    %506 = vmatpush.msra.mxu0 0.0
    %507 = vmatpush.msra.mxu0 0.0
    %508 = vmatpush.msra.mxu0 0.0
    %509 = vmatpush.msra.mxu0 0.0
    %510 = vmatpush.msra.mxu0 0.0
    %v511 = vand.u32 %v224, 4294901760
    %512 = vmatpush.msra.mxu0 %v511
    %v513 = vand.u32 %v220, 4294901760
    %514 = vmatmul.f32.gmra.mxu0 %v513
    %v515 = vpop.f32.mrf.mxu0
    %v516 = vadd.f32 %v494, %v515
    %517 = vdwg.mxu0
    %519 = vst [vmem:[#allocation1] ss:$2 sm:$0xff] %v46
    %v520 = vld.sshfl [vmem:[#allocation1] sm:$0xff pattern:$0x75316420]
    %v521 = vld.sshfl [vmem:[#allocation1 + $0x8] sm:$0xff pattern:$0x75316420]
    %v522 = vsel %vm64, %v520, 0
    %v524 = vsel %vm64, %v521, 0
    %526 = vmatpush.msra.mxu0 0.0
    %527 = vmatpush.msra.mxu0 0.0
    %528 = vmatpush.msra.mxu0 0.0
    %529 = vmatpush.msra.mxu0 0.0
    %530 = vmatpush.msra.mxu0 0.0
    %531 = vmatpush.msra.mxu0 0.0
    %532 = vmatpush.msra.mxu0 0.0
    %533 = vmatpush.msra.mxu0 0.0
    %534 = vmatpush.msra.mxu0 0.0
    %535 = vmatpush.msra.mxu0 0.0
    %536 = vmatpush.msra.mxu0 0.0
    %537 = vmatpush.msra.mxu0 0.0
    %538 = vmatpush.msra.mxu0 0.0
    %539 = vmatpush.msra.mxu0 0.0
    %540 = vmatpush.msra.mxu0 0.0
    %v541 = vand.u32 %v522, 4294901760
    %542 = vmatpush.msra.mxu0 %v541
    %v543 = vand.u32 %v220, 4294901760
    %v544 = vsub.f32 %v220, %v543
    %v545 = vand.u32 %v544, 4294901760
    %v546 = vsub.f32 %v544, %v545
    %v547 = vand.u32 %v546, 4294901760
    %548 = vmatmul.f32.gmra.mxu0 %v547
    %v549 = vpop.f32.mrf.mxu0
    %v550 = vadd.f32 0.0, %v549
    %551 = vdwg.mxu0
    %552 = vmatpush.msra.mxu0 0.0
    %553 = vmatpush.msra.mxu0 0.0
    %554 = vmatpush.msra.mxu0 0.0
    %555 = vmatpush.msra.mxu0 0.0
    %556 = vmatpush.msra.mxu0 0.0
    %557 = vmatpush.msra.mxu0 0.0
    %558 = vmatpush.msra.mxu0 0.0
    %559 = vmatpush.msra.mxu0 0.0
    %560 = vmatpush.msra.mxu0 0.0
    %561 = vmatpush.msra.mxu0 0.0
    %562 = vmatpush.msra.mxu0 0.0
    %563 = vmatpush.msra.mxu0 0.0
    %564 = vmatpush.msra.mxu0 0.0
    %565 = vmatpush.msra.mxu0 0.0
    %566 = vmatpush.msra.mxu0 0.0
    %v567 = vand.u32 %v522, 4294901760
    %v568 = vsub.f32 %v522, %v567
    %v569 = vand.u32 %v568, 4294901760
    %v570 = vsub.f32 %v568, %v569
    %v571 = vand.u32 %v570, 4294901760
    %572 = vmatpush.msra.mxu0 %v571
    %v573 = vand.u32 %v220, 4294901760
    %574 = vmatmul.f32.gmra.mxu0 %v573
    %v575 = vpop.f32.mrf.mxu0
    %v576 = vadd.f32 %v550, %v575
    %577 = vdwg.mxu0
    %578 = vmatpush.msra.mxu0 0.0
    %579 = vmatpush.msra.mxu0 0.0
    %580 = vmatpush.msra.mxu0 0.0
    %581 = vmatpush.msra.mxu0 0.0
    %582 = vmatpush.msra.mxu0 0.0
    %583 = vmatpush.msra.mxu0 0.0
    %584 = vmatpush.msra.mxu0 0.0
    %585 = vmatpush.msra.mxu0 0.0
    %586 = vmatpush.msra.mxu0 0.0
    %587 = vmatpush.msra.mxu0 0.0
    %588 = vmatpush.msra.mxu0 0.0
    %589 = vmatpush.msra.mxu0 0.0
    %590 = vmatpush.msra.mxu0 0.0
    %591 = vmatpush.msra.mxu0 0.0
    %592 = vmatpush.msra.mxu0 0.0
    %v593 = vand.u32 %v522, 4294901760
    %v594 = vsub.f32 %v522, %v593
    %595 = vmatpush.msra.mxu0 %v594
    %v596 = vand.u32 %v220, 4294901760
    %v597 = vsub.f32 %v220, %v596
    %598 = vmatmul.f32.gmra.mxu0 %v597
    %v599 = vpop.f32.mrf.mxu0
    %v600 = vadd.f32 %v576, %v599
    %601 = vdwg.mxu0
    %602 = vmatpush.msra.mxu0 0.0
    %603 = vmatpush.msra.mxu0 0.0
    %604 = vmatpush.msra.mxu0 0.0
    %605 = vmatpush.msra.mxu0 0.0
    %606 = vmatpush.msra.mxu0 0.0
    %607 = vmatpush.msra.mxu0 0.0
    %608 = vmatpush.msra.mxu0 0.0
    %609 = vmatpush.msra.mxu0 0.0
    %610 = vmatpush.msra.mxu0 0.0
    %611 = vmatpush.msra.mxu0 0.0
    %612 = vmatpush.msra.mxu0 0.0
    %613 = vmatpush.msra.mxu0 0.0
    %614 = vmatpush.msra.mxu0 0.0
    %615 = vmatpush.msra.mxu0 0.0
    %616 = vmatpush.msra.mxu0 0.0
    %v617 = vand.u32 %v522, 4294901760
    %618 = vmatpush.msra.mxu0 %v617
    %v619 = vand.u32 %v220, 4294901760
    %v620 = vsub.f32 %v220, %v619
    %v621 = vand.u32 %v620, 4294901760
    %622 = vmatmul.f32.gmra.mxu0 %v621
    %v623 = vpop.f32.mrf.mxu0
    %v624 = vadd.f32 %v600, %v623
    %625 = vdwg.mxu0
    %626 = vmatpush.msra.mxu0 0.0
    %627 = vmatpush.msra.mxu0 0.0
    %628 = vmatpush.msra.mxu0 0.0
    %629 = vmatpush.msra.mxu0 0.0
    %630 = vmatpush.msra.mxu0 0.0
    %631 = vmatpush.msra.mxu0 0.0
    %632 = vmatpush.msra.mxu0 0.0
    %633 = vmatpush.msra.mxu0 0.0
    %634 = vmatpush.msra.mxu0 0.0
    %635 = vmatpush.msra.mxu0 0.0
    %636 = vmatpush.msra.mxu0 0.0
    %637 = vmatpush.msra.mxu0 0.0
    %638 = vmatpush.msra.mxu0 0.0
    %639 = vmatpush.msra.mxu0 0.0
    %640 = vmatpush.msra.mxu0 0.0
    %v641 = vand.u32 %v522, 4294901760
    %v642 = vsub.f32 %v522, %v641
    %v643 = vand.u32 %v642, 4294901760
    %644 = vmatpush.msra.mxu0 %v643
    %v645 = vand.u32 %v220, 4294901760
    %646 = vmatmul.f32.gmra.mxu0 %v645
    %v647 = vpop.f32.mrf.mxu0
    %v648 = vadd.f32 %v624, %v647
    %649 = vdwg.mxu0
    %650 = vmatpush.msra.mxu0 0.0
    %651 = vmatpush.msra.mxu0 0.0
    %652 = vmatpush.msra.mxu0 0.0
    %653 = vmatpush.msra.mxu0 0.0
    %654 = vmatpush.msra.mxu0 0.0
    %655 = vmatpush.msra.mxu0 0.0
    %656 = vmatpush.msra.mxu0 0.0
    %657 = vmatpush.msra.mxu0 0.0
    %658 = vmatpush.msra.mxu0 0.0
    %659 = vmatpush.msra.mxu0 0.0
    %660 = vmatpush.msra.mxu0 0.0
    %661 = vmatpush.msra.mxu0 0.0
    %662 = vmatpush.msra.mxu0 0.0
    %663 = vmatpush.msra.mxu0 0.0
    %664 = vmatpush.msra.mxu0 0.0
    %v665 = vand.u32 %v522, 4294901760
    %666 = vmatpush.msra.mxu0 %v665
    %v667 = vand.u32 %v220, 4294901760
    %668 = vmatmul.f32.gmra.mxu0 %v667
    %v669 = vpop.f32.mrf.mxu0
    %v670 = vadd.f32 %v648, %v669
    %671 = vdwg.mxu0
    %672 = vmatpush.msra.mxu0 0.0
    %673 = vmatpush.msra.mxu0 0.0
    %674 = vmatpush.msra.mxu0 0.0
    %675 = vmatpush.msra.mxu0 0.0
    %676 = vmatpush.msra.mxu0 0.0
    %677 = vmatpush.msra.mxu0 0.0
    %678 = vmatpush.msra.mxu0 0.0
    %679 = vmatpush.msra.mxu0 0.0
    %680 = vmatpush.msra.mxu0 0.0
    %681 = vmatpush.msra.mxu0 0.0
    %682 = vmatpush.msra.mxu0 0.0
    %683 = vmatpush.msra.mxu0 0.0
    %684 = vmatpush.msra.mxu0 0.0
    %685 = vmatpush.msra.mxu0 0.0
    %686 = vmatpush.msra.mxu0 0.0
    %v687 = vand.u32 %v524, 4294901760
    %688 = vmatpush.msra.mxu0 %v687
    %v689 = vand.u32 %v220, 4294901760
    %v690 = vsub.f32 %v220, %v689
    %v691 = vand.u32 %v690, 4294901760
    %v692 = vsub.f32 %v690, %v691
    %v693 = vand.u32 %v692, 4294901760
    %694 = vmatmul.f32.gmra.mxu0 %v693
    %v695 = vpop.f32.mrf.mxu0
    %v696 = vadd.f32 0.0, %v695
    %697 = vdwg.mxu0
    %698 = vmatpush.msra.mxu0 0.0
    %699 = vmatpush.msra.mxu0 0.0
    %700 = vmatpush.msra.mxu0 0.0
    %701 = vmatpush.msra.mxu0 0.0
    %702 = vmatpush.msra.mxu0 0.0
    %703 = vmatpush.msra.mxu0 0.0
    %704 = vmatpush.msra.mxu0 0.0
    %705 = vmatpush.msra.mxu0 0.0
    %706 = vmatpush.msra.mxu0 0.0
    %707 = vmatpush.msra.mxu0 0.0
    %708 = vmatpush.msra.mxu0 0.0
    %709 = vmatpush.msra.mxu0 0.0
    %710 = vmatpush.msra.mxu0 0.0
    %711 = vmatpush.msra.mxu0 0.0
    %712 = vmatpush.msra.mxu0 0.0
    %v713 = vand.u32 %v524, 4294901760
    %v714 = vsub.f32 %v524, %v713
    %v715 = vand.u32 %v714, 4294901760
    %v716 = vsub.f32 %v714, %v715
    %v717 = vand.u32 %v716, 4294901760
    %718 = vmatpush.msra.mxu0 %v717
    %v719 = vand.u32 %v220, 4294901760
    %720 = vmatmul.f32.gmra.mxu0 %v719
    %v721 = vpop.f32.mrf.mxu0
    %v722 = vadd.f32 %v696, %v721
    %723 = vdwg.mxu0
    %724 = vmatpush.msra.mxu0 0.0
    %725 = vmatpush.msra.mxu0 0.0
    %726 = vmatpush.msra.mxu0 0.0
    %727 = vmatpush.msra.mxu0 0.0
    %728 = vmatpush.msra.mxu0 0.0
    %729 = vmatpush.msra.mxu0 0.0
    %730 = vmatpush.msra.mxu0 0.0
    %731 = vmatpush.msra.mxu0 0.0
    %732 = vmatpush.msra.mxu0 0.0
    %733 = vmatpush.msra.mxu0 0.0
    %734 = vmatpush.msra.mxu0 0.0
    %735 = vmatpush.msra.mxu0 0.0
    %736 = vmatpush.msra.mxu0 0.0
    %737 = vmatpush.msra.mxu0 0.0
    %738 = vmatpush.msra.mxu0 0.0
    %v739 = vand.u32 %v524, 4294901760
    %v740 = vsub.f32 %v524, %v739
    %741 = vmatpush.msra.mxu0 %v740
    %v742 = vand.u32 %v220, 4294901760
    %v743 = vsub.f32 %v220, %v742
    %744 = vmatmul.f32.gmra.mxu0 %v743
    %v745 = vpop.f32.mrf.mxu0
    %v746 = vadd.f32 %v722, %v745
    %747 = vdwg.mxu0
    %748 = vmatpush.msra.mxu0 0.0
    %749 = vmatpush.msra.mxu0 0.0
    %750 = vmatpush.msra.mxu0 0.0
    %751 = vmatpush.msra.mxu0 0.0
    %752 = vmatpush.msra.mxu0 0.0
    %753 = vmatpush.msra.mxu0 0.0
    %754 = vmatpush.msra.mxu0 0.0
    %755 = vmatpush.msra.mxu0 0.0
    %756 = vmatpush.msra.mxu0 0.0
    %757 = vmatpush.msra.mxu0 0.0
    %758 = vmatpush.msra.mxu0 0.0
    %759 = vmatpush.msra.mxu0 0.0
    %760 = vmatpush.msra.mxu0 0.0
    %761 = vmatpush.msra.mxu0 0.0
    %762 = vmatpush.msra.mxu0 0.0
    %v763 = vand.u32 %v524, 4294901760
    %764 = vmatpush.msra.mxu0 %v763
    %v765 = vand.u32 %v220, 4294901760
    %v766 = vsub.f32 %v220, %v765
    %v767 = vand.u32 %v766, 4294901760
    %768 = vmatmul.f32.gmra.mxu0 %v767
    %v769 = vpop.f32.mrf.mxu0
    %v770 = vadd.f32 %v746, %v769
    %771 = vdwg.mxu0
    %772 = vmatpush.msra.mxu0 0.0
    %773 = vmatpush.msra.mxu0 0.0
    %774 = vmatpush.msra.mxu0 0.0
    %775 = vmatpush.msra.mxu0 0.0
    %776 = vmatpush.msra.mxu0 0.0
    %777 = vmatpush.msra.mxu0 0.0
    %778 = vmatpush.msra.mxu0 0.0
    %779 = vmatpush.msra.mxu0 0.0
    %780 = vmatpush.msra.mxu0 0.0
    %781 = vmatpush.msra.mxu0 0.0
    %782 = vmatpush.msra.mxu0 0.0
    %783 = vmatpush.msra.mxu0 0.0
    %784 = vmatpush.msra.mxu0 0.0
    %785 = vmatpush.msra.mxu0 0.0
    %786 = vmatpush.msra.mxu0 0.0
    %v787 = vand.u32 %v524, 4294901760
    %v788 = vsub.f32 %v524, %v787
    %v789 = vand.u32 %v788, 4294901760
    %790 = vmatpush.msra.mxu0 %v789
    %v791 = vand.u32 %v220, 4294901760
    %792 = vmatmul.f32.gmra.mxu0 %v791
    %v793 = vpop.f32.mrf.mxu0
    %v794 = vadd.f32 %v770, %v793
    %795 = vdwg.mxu0
    %796 = vmatpush.msra.mxu0 0.0
    %797 = vmatpush.msra.mxu0 0.0
    %798 = vmatpush.msra.mxu0 0.0
    %799 = vmatpush.msra.mxu0 0.0
    %800 = vmatpush.msra.mxu0 0.0
    %801 = vmatpush.msra.mxu0 0.0
    %802 = vmatpush.msra.mxu0 0.0
    %803 = vmatpush.msra.mxu0 0.0
    %804 = vmatpush.msra.mxu0 0.0
    %805 = vmatpush.msra.mxu0 0.0
    %806 = vmatpush.msra.mxu0 0.0
    %807 = vmatpush.msra.mxu0 0.0
    %808 = vmatpush.msra.mxu0 0.0
    %809 = vmatpush.msra.mxu0 0.0
    %810 = vmatpush.msra.mxu0 0.0
    %v811 = vand.u32 %v524, 4294901760
    %812 = vmatpush.msra.mxu0 %v811
    %v813 = vand.u32 %v220, 4294901760
    %814 = vmatmul.f32.gmra.mxu0 %v813
    %v815 = vpop.f32.mrf.mxu0
    %v816 = vadd.f32 %v794, %v815
    %817 = vdwg.mxu0
    %v818 = vxor.u32 %v370, 2147483648
    %v819 = vxor.u32 %v516, 2147483648
    %v820 = vxor.u32 %v670, 2147483648
    %v821 = vxor.u32 %v816, 2147483648
    %v822 = vmul.f32 %v818, 1.442695
    %v823 = vpow.pop %v822
    %v824 = vmul.f32 %v819, 1.442695
    %v825 = vpow.pop %v824
    %v826 = vmul.f32 %v820, 1.442695
    %v827 = vpow.pop %v826
    %v828 = vmul.f32 %v821, 1.442695
    %v829 = vpow.pop %v828
    %v830 = vadd.f32 %v823, 1.0
    %v831 = vadd.f32 %v825, 1.0
    %v832 = vadd.f32 %v827, 1.0
    %v833 = vadd.f32 %v829, 1.0
    %v834 = vrcp.pop %v830
    %v835 = vmul.f32 %v830, %v834
    %v836 = vsub.f32 1.0, %v835
    %v837 = vmul.f32 %v834, %v836
    %v838 = vadd.f32 %v834, %v837
    %vm839 = vweird.f32 %v830
    %vm840 = vweird.f32 %v834
    %vm841 = vmor %vm839, %vm840
    %v842 = vsel %vm841, %v834, %v838
    %v843 = vand.u32 2147483647, %v830
    %vm844 = vcmp.eq.f32.partialorder %v843, 8.507059e+37
    %v845 = vand.u32 %v830, 2147483648
    %v846 = vor.u32 1.1754944e-38, %v845
    %v847 = vsel %vm844, %v846, %v842
    %v848 = vmul.f32 1.0, %v847
    %v849 = vrcp.pop %v831
    %v850 = vmul.f32 %v831, %v849
    %v851 = vsub.f32 1.0, %v850
    %v852 = vmul.f32 %v849, %v851
    %v853 = vadd.f32 %v849, %v852
    %vm854 = vweird.f32 %v831
    %vm855 = vweird.f32 %v849
    %vm856 = vmor %vm854, %vm855
    %v857 = vsel %vm856, %v849, %v853
    %v858 = vand.u32 2147483647, %v831
    %vm859 = vcmp.eq.f32.partialorder %v858, 8.507059e+37
    %v860 = vand.u32 %v831, 2147483648
    %v861 = vor.u32 1.1754944e-38, %v860
    %v862 = vsel %vm859, %v861, %v857
    %v863 = vmul.f32 1.0, %v862
    %v864 = vrcp.pop %v832
    %v865 = vmul.f32 %v832, %v864
    %v866 = vsub.f32 1.0, %v865
    %v867 = vmul.f32 %v864, %v866
    %v868 = vadd.f32 %v864, %v867
    %vm869 = vweird.f32 %v832
    %vm870 = vweird.f32 %v864
    %vm871 = vmor %vm869, %vm870
    %v872 = vsel %vm871, %v864, %v868
    %v873 = vand.u32 2147483647, %v832
    %vm874 = vcmp.eq.f32.partialorder %v873, 8.507059e+37
    %v875 = vand.u32 %v832, 2147483648
    %v876 = vor.u32 1.1754944e-38, %v875
    %v877 = vsel %vm874, %v876, %v872
    %v878 = vmul.f32 1.0, %v877
    %v879 = vrcp.pop %v833
    %v880 = vmul.f32 %v833, %v879
    %v881 = vsub.f32 1.0, %v880
    %v882 = vmul.f32 %v879, %v881
    %v883 = vadd.f32 %v879, %v882
    %vm884 = vweird.f32 %v833
    %vm885 = vweird.f32 %v879
    %vm886 = vmor %vm884, %vm885
    %v887 = vsel %vm886, %v879, %v883
    %v888 = vand.u32 2147483647, %v833
    %vm889 = vcmp.eq.f32.partialorder %v888, 8.507059e+37
    %v890 = vand.u32 %v833, 2147483648
    %v891 = vor.u32 1.1754944e-38, %v890
    %v892 = vsel %vm889, %v891, %v887
    %v893 = vmul.f32 1.0, %v892
    %v894 = vperm.slane %v848, 0
    %v895 = vperm.slane %v863, 0
    %v896 = vperm.slane %v878, 0
    %v897 = vperm.slane %v893, 0
    %898 = vst [vmem:[#allocation1] ss:$2 sm:$0xff] %v45
    %v899 = vld.sshfl [vmem:[#allocation1] sm:$0xff pattern:$0x75316420]
    %v900 = vld.sshfl [vmem:[#allocation1 + $0x8] sm:$0xff pattern:$0x75316420]
    %s901 = scalar_lea.vmem [#allocation1], 16
    %902 = vst [vmem:[%s901] ss:$2 sm:$0xff] %v46
    %v903 = vld.sshfl [vmem:[#allocation1 + $0x10] sm:$0xff pattern:$0x75316420]
    %v904 = vld.sshfl [vmem:[#allocation1 + $0x18] sm:$0xff pattern:$0x75316420]
    %v909 = vmul.f32 %v894, %v899
    %v910 = vmul.f32 %v895, %v900
    %v911 = vmul.f32 %v896, %v903
    %v912 = vmul.f32 %v897, %v904
    %913 = vst [vmem:[#allocation1] ss:$2 sm:$0xff] %v45
    %v914 = vld.sshfl [vmem:[#allocation1] sm:$0xff pattern:$0x75316420]
    %v915 = vld.sshfl [vmem:[#allocation1 + $0x8] sm:$0xff pattern:$0x75316420]
    %s916 = scalar_lea.vmem [#allocation1], 16
    %917 = vst [vmem:[%s916] ss:$2 sm:$0xff] %v46
    %v918 = vld.sshfl [vmem:[#allocation1 + $0x10] sm:$0xff pattern:$0x75316420]
    %v919 = vld.sshfl [vmem:[#allocation1 + $0x18] sm:$0xff pattern:$0x75316420]
    %v924 = vmul.f32 %v198, %v914
    %v925 = vmul.f32 %v198, %v915
    %v926 = vmul.f32 %v213, %v918
    %v927 = vmul.f32 %v213, %v919
    %v928 = vmax.f32 %v909, %v924
    %v929 = vmax.f32 %v910, %v925
    %v930 = vmax.f32 %v911, %v926
    %v931 = vmax.f32 %v912, %v927
    %v936 = vrot.slane %v929, 4
    %v937 = vrot.slane %v931, 4
    %v938 = vsel %vm64, %v928, %v936
    %v939 = vsel %vm64, %v930, %v937
    %942 = vst [vmem:[#allocation7] sm:$0xff] %v938
    %943 = vst [vmem:[#allocation7 + $0x8] sm:$0xff] %v939
    // Predicated region
    $region22: #{tpu_custom_call.1} parent=1 // pred_check
      _
    $region23: #{tpu_custom_call.1} parent=1 // pred_check_branch
      %945 = sbr.rel (0) target = $region25
    $region24: #{tpu_custom_call.1} parent=1 // pred_region
      %947 = vsyncadd [#allocation4], 0
      %s948 = sshll.u32 [#allocation7], 4
      %s949 = int_to_ptr.vmem [resolvable:$true] %s948
      %s950 = sshll.u32 %s3, 4
      %s951 = int_to_ptr.hbm [resolvable:$true] %s950
      %956 = dma.vmem_to_hbm [thread:$0]  %s949, 256, %s951, [#allocation4], 128, 128, 8
    $region25: #{tpu_custom_call.1} parent=1 // pred_fallthru
      _
    // Predicated region
    $region26: #{tpu_custom_call.1} parent=1 // pred_check
      _
    $region27: #{tpu_custom_call.1} parent=1 // pred_check_branch
      %958 = sbr.rel (0) target = $region29
    $region28: #{tpu_custom_call.1} parent=1 // pred_region
      %960 = dma.done [#allocation4], 256
    $region29: #{tpu_custom_call.1} parent=1 // pred_fallthru
      _
    %961 = vsyncpa [#allocation3], 1
    %962 = vsyncpa [#allocation6], 1
    %963 = vsyncpa [#allocation4], 1

</llo_original>
